<compile_context>
chip_gen: v7x
topology: tpu7x:2x2x1
jax: 0.10.0
libtpu: 0.0.40
codegen_flags: <defaults>
</compile_context>

<pallas_src>
import functools

import jax
import jax.numpy as jnp
from jax.experimental import pallas as pl
from jax.experimental.pallas import tpu as pltpu

EPS_WS = 1e-5   # Conv2d_WS epsilon (added to std)
EPS_GN = 1e-5   # nn.GroupNorm default eps
GROUPS = 32     # nn.GroupNorm(32, out_channels)


def _round_up(x, m):
    return (x + m - 1) // m * m


# ---------------------------------------------------------------------------
# Weight standardization kernel (Conv2d_WS preprocessing of the weights)
# ---------------------------------------------------------------------------
def _ws_kernel(w_ref, o_ref):
    # w_ref: (O, K) per-output-channel flattened weight
    w = w_ref[...]
    k = w.shape[1]
    mean = jnp.mean(w, axis=1, keepdims=True)
    c = w - mean
    # torch .std(dim=1) is the unbiased std (translation invariant -> use centered w)
    var = jnp.sum(c * c, axis=1, keepdims=True) / (k - 1)
    o_ref[...] = c / (jnp.sqrt(var) + EPS_WS)


def weight_standardize(w_oihw):
    o = w_oihw.shape[0]
    flat = w_oihw.reshape(o, -1).astype(jnp.float32)
    assert flat.shape[1] > 1, "Conv2d_WS unbiased std needs >1 element per filter"
    out = pl.pallas_call(
        _ws_kernel,
        out_shape=jax.ShapeDtypeStruct(flat.shape, jnp.float32),
    )(flat)
    return out.reshape(w_oihw.shape)


# ---------------------------------------------------------------------------
# Fused ResidualBlock kernel (one sample per grid step)
# ---------------------------------------------------------------------------
def _resblock_kernel(x_ref, w1_ref, w2_ref, pmat_ref, gb_ref,
                     o_ref, t1_ref,
                     *, H, W, WP, P, PAD, Cout, use_proj):
    pmat = pmat_ref[...]                    # (Cout, Cout) f32 group membership
    inv_n = 1.0 / float(H * W * (Cout // GROUPS))
    span = P + 2 * WP                       # rows needed by all 9 taps
    lo = PAD - WP                           # aligned start of the tap window (>= 8)

    # Interior-pixel mask generated in-kernel (no lane-1 DMA buffer; plain multiply
    # instead of compare+select per use).
    ridx = jax.lax.broadcasted_iota(jnp.int32, (P, 1), 0)
    hh = ridx // WP
    ww = ridx - hh * WP
    m = ((hh >= 1) & (hh <= H) & (ww >= 1) & (ww <= W)).astype(jnp.float32)  # (P, 1)

    def gn_moments(stat_rows):              # (R, Cout) sums -> per-group means
        return jnp.dot(stat_rows, pmat, preferred_element_type=jnp.float32) * inv_n

    def gn_apply(t, gm, gsq, gamma, beta):
        # NOTE: E[x^2]-E[x]^2 in f32 with clamp; use two-pass stats if production
        # activations are very large in magnitude.
        var = jnp.maximum(gsq - gm * gm, 0.0)
        scale = gamma * jax.lax.rsqrt(var + EPS_GN)
        return t * scale + (beta - gm * scale)

    def group_norm(t, t_masked, gamma, beta):
        s = jnp.sum(t_masked, axis=0, keepdims=True)               # (1, Cout)
        sq = jnp.sum(t_masked * t_masked, axis=0, keepdims=True)   # (1, Cout)
        g = gn_moments(jnp.concatenate([s, sq], axis=0))           # (2, Cout)
        return gn_apply(t, g[0:1, :], g[1:2, :], gamma, beta)

    def conv3x3(row_slice, w_col):
        # Three bulk row-shifted loads (only the +-1 shifted ones are sublane-
        # misaligned); all 9 taps are then 8-aligned slices of those, so the im2col
        # lane-concat needs ~3x less relayout work than 9 independent tap loads.
        srcs = (row_slice(lo - 1), row_slice(lo), row_slice(lo + 1))   # kw = 0, 1, 2
        taps = [srcs[kw][kh * WP:kh * WP + P, :]
                for kh in range(3) for kw in range(3)]
        patch = jnp.concatenate(taps, axis=1)                          # (P, 9*C) bf16
        return jnp.dot(patch, w_col, preferred_element_type=jnp.float32)

    # Zero only the 2*PAD halo rows of the bf16 conv2 staging scratch (its interior
    # is fully overwritten below).  Done every step so it is also correct when the
    # parallel grid axis is sharded across cores.
    zhalo = jnp.zeros((PAD, Cout), jnp.bfloat16)
    t1_ref[0:PAD, :] = zhalo
    t1_ref[PAD + P:PAD + P + PAD, :] = zhalo

    g1, b1 = gb_ref[0:1, :], gb_ref[1:2, :]
    g2, b2 = gb_ref[2:3, :], gb_ref[3:4, :]

    # --- conv1 (3x3 WS conv, bf16 operands / f32 accumulate; 1x1 proj folded) ---
    ycat = conv3x3(lambda s: x_ref[s:s + span, :], w1_ref[...])

    if use_proj:
        # Fused GN statistics for conv1 output and projection output: one reduction
        # pass over (P, 2*Cout) and a single (4, Cout) membership matmul.
        ycat_m = ycat * m
        s = jnp.sum(ycat_m, axis=0, keepdims=True)                 # (1, 2*Cout)
        sq = jnp.sum(ycat_m * ycat_m, axis=0, keepdims=True)       # (1, 2*Cout)
        st = jnp.concatenate([s[:, :Cout], sq[:, :Cout],
                              s[:, Cout:], sq[:, Cout:]], axis=0)  # (4, Cout)
        g = gn_moments(st)
        y1 = gn_apply(ycat[:, :Cout], g[0:1, :], g[1:2, :], g1, b1)
        res = gn_apply(ycat[:, Cout:], g[2:3, :], g[3:4, :],
                       gb_ref[4:5, :], gb_ref[5:6, :])
    else:
        y1 = group_norm(ycat, ycat * m, g1, b1)
        res = x_ref[PAD:PAD + P, :].astype(jnp.float32)   # identity residual (f32)

    # --- GN1 + ReLU, staged (masked, bf16) into the halo'd scratch for conv2 ---
    t1_ref[PAD:PAD + P, :] = (jnp.maximum(y1, 0.0) * m).astype(jnp.bfloat16)

    # --- conv2 (3x3 WS conv) + GN2 ---
    y2 = conv3x3(lambda s: t1_ref[s:s + span, :], w2_ref[...])
    y2 = group_norm(y2, y2 * m, g2, b2)

    # --- residual add + ReLU (off-image rows are sliced away by the wrapper) ---
    # NOTE: Cout=64 output stores are masked vst's; lane-dense (>=128) output slabs
    # only pay off at production channel counts, so no padding is done here.
    o_ref[...] = jnp.maximum(y2 + res, 0.0)
    # TODO(synk): sample='down' (MaxPool2d 3x3/s2) and sample='up' (nearest x2)
    # branches are not implemented; the module is used with sample=None here.
    # TODO(synk): for production H/W/C add a row-block grid axis (1-row halo) with
    # cross-block GroupNorm stat accumulation to stay inside v7x's 64 MiB VMEM.


# ---------------------------------------------------------------------------
# One-time parameter preparation (weight standardization, im2col, proj fold)
# ---------------------------------------------------------------------------
def prepare_params(params, cin):
    cout = params["w1"].shape[0]
    assert cout % GROUPS == 0
    use_proj = (cin != cout)

    def im2col_w(w_ws):               # OIHW -> ((kh*3+kw)*I + i, O)
        o, i = w_ws.shape[0], w_ws.shape[1]
        return jnp.transpose(w_ws, (2, 3, 1, 0)).reshape(9 * i, o)

    w1_col = im2col_w(weight_standardize(params["w1"]))          # (9*Cin, Cout)
    w2_col = im2col_w(weight_standardize(params["w2"]))          # (9*Cout, Cout)

    if use_proj:
        wr = weight_standardize(params["wr"])[:, :, 0, 0]        # (Cout, Cin)
        wr_col = jnp.zeros((9 * cin, cout), jnp.float32)
        wr_col = wr_col.at[4 * cin:5 * cin, :].set(wr.T)         # center tap only
        w1_col = jnp.concatenate([w1_col, wr_col], axis=1)       # (9*Cin, 2*Cout)

    cpg = cout // GROUPS
    gid = jnp.arange(cout) // cpg
    pmat = (gid[:, None] == gid[None, :]).astype(jnp.float32)

    rows = [params["g1"], params["b1"], params["g2"], params["b2"]]
    if use_proj:
        rows += [params["gr"], params["br"]]
    gb = jnp.stack([v.reshape(cout).astype(jnp.float32) for v in rows])

    return {"w1": w1_col.astype(jnp.bfloat16),
            "w2": w2_col.astype(jnp.bfloat16),
            "pmat": pmat, "gb": gb}


# ---------------------------------------------------------------------------
# Forward wrapper (activation layout change + fused kernel call)
# ---------------------------------------------------------------------------
@jax.jit
def residual_block_forward(x_nchw, prep):
    N, Cin, H, W = x_nchw.shape
    Cout = prep["pmat"].shape[0]
    use_proj = (prep["w1"].shape[1] == 2 * Cout)

    HP = H + 2
    WP = _round_up(W + 2, 8)          # pad width so +-WP row shifts stay aligned
    P = HP * WP                       # flattened padded image rows
    PAD = _round_up(WP + 1, 8)        # halo so every tap window stays in-bounds
    PBIG = P + 2 * PAD

    # NCHW -> flat halo'd bf16 rows (N, PBIG, Cin)
    x = jnp.transpose(x_nchw, (0, 2, 3, 1)).astype(jnp.bfloat16)
    x = jnp.pad(x, ((0, 0), (1, 1), (1, WP - W - 1), (0, 0)))    # (N, HP, WP, Cin)
    x = x.reshape(N, P, Cin)
    x = jnp.pad(x, ((0, 0), (PAD, PAD), (0, 0)))                 # (N, PBIG, Cin)

    def full(shape):
        return pl.BlockSpec(shape, lambda n: (0,) * len(shape))

    kern = functools.partial(_resblock_kernel, H=H, W=W, WP=WP, P=P, PAD=PAD,
                             Cout=Cout, use_proj=use_proj)
    out_flat = pl.pallas_call(
        kern,
        out_shape=jax.ShapeDtypeStruct((N, P, Cout), jnp.float32),
        grid=(N,),
        in_specs=[
            pl.BlockSpec((None, PBIG, Cin), lambda n: (n, 0, 0)),
            full(prep["w1"].shape),
            full(prep["w2"].shape),
            full(prep["pmat"].shape),
            full(prep["gb"].shape),
        ],
        out_specs=pl.BlockSpec((None, P, Cout), lambda n: (n, 0, 0)),
        scratch_shapes=[pltpu.VMEM((PBIG, Cout), jnp.bfloat16)],
        compiler_params=pltpu.CompilerParams(
            dimension_semantics=("parallel",),
            vmem_limit_bytes=32 * 1024 * 1024),
    )(x, prep["w1"], prep["w2"], prep["pmat"], prep["gb"])

    # Drop padding rows/cols, back to NCHW
    out = out_flat.reshape(N, HP, WP, Cout)[:, 1:H + 1, 1:W + 1, :]
    return jnp.transpose(out, (0, 3, 1, 2))


# ---------------------------------------------------------------------------
# Pure-JAX f32 reference (for verification only)
# ---------------------------------------------------------------------------
def _ref_ws(w):
    mean = w.mean(axis=(1, 2, 3), keepdims=True)
    c = w - mean
    std = jnp.std(c.reshape(w.shape[0], -1), axis=1, ddof=1).reshape(-1, 1, 1, 1)
    return c / (std + EPS_WS)


def _ref_gn(x, gamma, beta):
    N, C, H, W = x.shape
    xr = x.reshape(N, GROUPS, -1)
    m = xr.mean(axis=2, keepdims=True)
    v = xr.var(axis=2, keepdims=True)
    xn = ((xr - m) / jnp.sqrt(v + EPS_GN)).reshape(N, C, H, W)
    return xn * gamma.reshape(1, C, 1, 1) + beta.reshape(1, C, 1, 1)


def _ref_forward(x, p):
    conv = lambda a, w, pad: jax.lax.conv_general_dilated(
        a, w, (1, 1), ((pad, pad), (pad, pad)),
        dimension_numbers=("NCHW", "OIHW", "NCHW"))
    cin, cout = x.shape[1], p["w1"].shape[0]
    if cin != cout:
        residual = _ref_gn(conv(x, _ref_ws(p["wr"]), 0), p["gr"], p["br"])
    else:
        residual = x
    out = _ref_gn(conv(x, _ref_ws(p["w1"]), 1), p["g1"], p["b1"])
    out = jnp.maximum(out, 0.0)
    out = _ref_gn(conv(out, _ref_ws(p["w2"]), 1), p["g2"], p["b2"])
    return jnp.maximum(out + residual, 0.0)


if __name__ == "__main__":
    key = jax.random.PRNGKey(0)

    def make_params(k, cin, cout):
        ks = jax.random.split(k, 9)
        return {
            "w1": 0.1 * jax.random.normal(ks[0], (cout, cin, 3, 3), jnp.float32),
            "w2": 0.1 * jax.random.normal(ks[1], (cout, cout, 3, 3), jnp.float32),
            "wr": 0.1 * jax.random.normal(ks[2], (cout, cin, 1, 1), jnp.float32),
            "g1": 1.0 + 0.1 * jax.random.normal(ks[3], (cout,), jnp.float32),
            "b1": 0.1 * jax.random.normal(ks[4], (cout,), jnp.float32),
            "g2": 1.0 + 0.1 * jax.random.normal(ks[5], (cout,), jnp.float32),
            "b2": 0.1 * jax.random.normal(ks[6], (cout,), jnp.float32),
            "gr": 1.0 + 0.1 * jax.random.normal(ks[7], (cout,), jnp.float32),
            "br": 0.1 * jax.random.normal(ks[8], (cout,), jnp.float32),
        }

    k1, k2, kx1, kx2 = jax.random.split(key, 4)

    # Case 1: in_channels != out_channels -> projection (convr + bnr) residual path
    N, Cin, Cout, H, W = 2, 32, 64, 16, 16
    params = make_params(k1, Cin, Cout)
    prep = jax.tree_util.tree_map(jax.block_until_ready, prepare_params(params, Cin))
    x = jax.random.normal(kx1, (N, Cin, H, W), jnp.float32)
    out = jax.block_until_ready(residual_block_forward(x, prep))
    ref = _ref_forward(x, params)
    assert out.shape == (N, Cout, H, W)
    err = float(jnp.max(jnp.abs(out - ref)))
    # bf16 MXU operands / bf16 activations vs f32 reference
    assert jnp.allclose(out, ref, atol=5e-2, rtol=5e-2), ("proj path", err)

    # Case 2: in_channels == out_channels -> identity residual path
    N2, C2, H2, W2 = 1, 64, 12, 12
    params2 = make_params(k2, C2, C2)
    prep2 = jax.tree_util.tree_map(jax.block_until_ready, prepare_params(params2, C2))
    x2 = jax.random.normal(kx2, (N2, C2, H2, W2), jnp.float32)
    out2 = jax.block_until_ready(residual_block_forward(x2, prep2))
    ref2 = _ref_forward(x2, params2)
    assert out2.shape == (N2, C2, H2, W2)
    err2 = float(jnp.max(jnp.abs(out2 - ref2)))
    assert jnp.allclose(out2, ref2, atol=5e-2, rtol=5e-2), ("identity path", err2)

    print("KERNEL_OK")
</pallas_src>

<mosaic_0001>
module attributes {stable_mosaic.version = 11 : i64} {
  func.func @_ws_kernel(%arg0: memref<64x288xf32, #tpu.memory_space<vmem>>, %arg1: memref<64x288xf32, #tpu.memory_space<vmem>>) attributes {dimension_semantics = [], scalar_prefetch = 0 : i64, scratch_operands = 0 : i64, tpu.core_type = #tpu.core_type<tc>} {
    %c0 = arith.constant 0 : index
    %c0_0 = arith.constant 0 : index
    %0 = vector.load %arg0[%c0, %c0_0] : memref<64x288xf32, #tpu.memory_space<vmem>>, vector<64x288xf32>
    %cst = arith.constant dense<0.000000e+00> : vector<64xf32>
    %1 = vector.multi_reduction <add>, %0, %cst [1] : vector<64x288xf32> to vector<64xf32>
    %2 = vector.shape_cast %1 : vector<64xf32> to vector<64x1xf32>
    %cst_1 = arith.constant 2.880000e+02 : f32
    %3 = vector.broadcast %cst_1 : f32 to vector<64x1xf32>
    %4 = arith.divf %2, %3 : vector<64x1xf32>
    %5 = vector.broadcast %4 : vector<64x1xf32> to vector<64x288xf32>
    %6 = arith.subf %0, %5 : vector<64x288xf32>
    %7 = arith.mulf %6, %6 : vector<64x288xf32>
    %cst_2 = arith.constant dense<0.000000e+00> : vector<64xf32>
    %8 = vector.multi_reduction <add>, %7, %cst_2 [1] : vector<64x288xf32> to vector<64xf32>
    %9 = vector.shape_cast %8 : vector<64xf32> to vector<64x1xf32>
    %cst_3 = arith.constant 2.870000e+02 : f32
    %10 = vector.broadcast %cst_3 : f32 to vector<64x1xf32>
    %11 = arith.divf %9, %10 : vector<64x1xf32>
    %12 = math.sqrt %11 : vector<64x1xf32>
    %cst_4 = arith.constant 9.99999974E-6 : f32
    %13 = vector.broadcast %cst_4 : f32 to vector<64x1xf32>
    %14 = arith.addf %12, %13 : vector<64x1xf32>
    %15 = vector.broadcast %14 : vector<64x1xf32> to vector<64x288xf32>
    %16 = arith.divf %6, %15 : vector<64x288xf32>
    %c0_5 = arith.constant 0 : index
    %c0_6 = arith.constant 0 : index
    %17 = vector.load %arg1[%c0_5, %c0_6] : memref<64x288xf32, #tpu.memory_space<vmem>>, vector<64x288xf32>
    tpu.vector_store %arg1[%c0_5, %c0_6], %16 {strides = array<i32>} : memref<64x288xf32, #tpu.memory_space<vmem>>, vector<64x288xf32>,
    return
  }
}

</mosaic_0001>

<llo_original>
// kernel: tpu_custom_call.1
$region0: #{tpu_custom_call.1}
  #allocation0 [shape = 'u32[]', space=smem, size = 0x4, offset = 0x4, fixed_abs, tag = 'smem constant byte address 0x4 - core index']
  #allocation1 [shape = 'u32[144,128]{1,0:T(1,128)}', space=vmem, size = 0x12000, scoped, tag = 'internal scratch']
  %s0 = inlined_call_operand.hbm [shape: f32[64,288], index: 0, kind: input, shape index: {}]
  %s1 = inlined_call_operand.hbm [shape: f32[64,288], index: 1, kind: output, shape index: {}]
  %s2 = sld [smem:[#allocation0]]
  $region18: #{tpu_custom_call.1} parent=0
    _
  %s4 = ssub.s32 1, %s2
  %s5 = scalar_select 0, %s4, %s2
  $region1: #{tpu_custom_call.1} parent=0
    #allocation2 [shape = 'u8[98304]{0}', space=vmem, size = 0x18000, scoped, tag = 'input window, operand 0, single buffered']
    #allocation3 [shape = 's32[1]{0}', space=sflag, size = 0x4, scoped, tag = 'scoped memory for tpu_custom_call.1']
    #allocation4 [shape = 's32[1]{0}', space=sflag, size = 0x4, scoped, tag = 'scoped memory for tpu_custom_call.1']
    #allocation5 [shape = 'u8[98304]{0}', space=vmem, size = 0x18000, scoped, tag = 'output window, operand 0, single buffered']
    %6 = vsyncpa [#allocation3], 0
    %7 = vsyncpa [#allocation4], 0
    // Predicated region
    $region2: #{tpu_custom_call.1} parent=1 // pred_check
      _
    $region3: #{tpu_custom_call.1} parent=1 // pred_check_branch
      %9 = sbr.rel (0) target = $region5
    $region4: #{tpu_custom_call.1} parent=1 // pred_region
      %s11 = ssub.s32 3072, 3072
      %12 = vsyncadd [#allocation3], %s11
      %s13 = sshll.u32 [#allocation2], 4
      %s14 = int_to_ptr.vmem [resolvable:$true] %s13
      %19 = dma.hbm_to_vmem [thread:$0]  %s0, 3072, %s14, [#allocation3], 384, 384, 24
    $region5: #{tpu_custom_call.1} parent=1 // pred_fallthru
      _
    // Predicated region
    $region6: #{tpu_custom_call.1} parent=1 // pred_check
      _
    $region7: #{tpu_custom_call.1} parent=1 // pred_check_branch
      %21 = sbr.rel (0) target = $region9
    $region8: #{tpu_custom_call.1} parent=1 // pred_region
      %22 = dma.done [#allocation3], 3072
    $region9: #{tpu_custom_call.1} parent=1 // pred_fallthru
      _
    %v23 = vld [vmem:[#allocation2] sm:$0xff]
    %v24 = vld [vmem:[#allocation2 + $0x8] sm:$0xff]
    %v25 = vld [vmem:[#allocation2 + $0x10] sm:$0xff]
    %v26 = vld [vmem:[#allocation2 + $0x18] sm:$0xff]
    %v27 = vld [vmem:[#allocation2 + $0x20] sm:$0xff]
    %v28 = vld [vmem:[#allocation2 + $0x28] sm:$0xff]
    %v29 = vld [vmem:[#allocation2 + $0x30] sm:$0xff]
    %v30 = vld [vmem:[#allocation2 + $0x38] sm:$0xff]
    %v31 = vld [vmem:[#allocation2 + $0x40] sm:$0xff]
    %v32 = vld [vmem:[#allocation2 + $0x48] sm:$0xff]
    %v33 = vld [vmem:[#allocation2 + $0x50] sm:$0xff]
    %v34 = vld [vmem:[#allocation2 + $0x58] sm:$0xff]
    %v35 = vld [vmem:[#allocation2 + $0x60] sm:$0xff]
    %v36 = vld [vmem:[#allocation2 + $0x68] sm:$0xff]
    %v37 = vld [vmem:[#allocation2 + $0x70] sm:$0xff]
    %v38 = vld [vmem:[#allocation2 + $0x78] sm:$0xff]
    %v39 = vld [vmem:[#allocation2 + $0x80] sm:$0xff]
    %v40 = vld [vmem:[#allocation2 + $0x88] sm:$0xff]
    %v41 = vld [vmem:[#allocation2 + $0x90] sm:$0xff]
    %v42 = vld [vmem:[#allocation2 + $0x98] sm:$0xff]
    %v43 = vld [vmem:[#allocation2 + $0xa0] sm:$0xff]
    %v44 = vld [vmem:[#allocation2 + $0xa8] sm:$0xff]
    %v45 = vld [vmem:[#allocation2 + $0xb0] sm:$0xff]
    %v46 = vld [vmem:[#allocation2 + $0xb8] sm:$0xff]
    %v47 = vadd.f32 %v23, %v24
    %vm48 = vcmask 261120
    %v49 = vsel %vm48, %v25, 0.0
    %v50 = vadd.f32 %v47, %v49
    %51 = vadd.xlane.f32.xlu0 %v50
    %v52 = vpop.xlane.xlu0 %51
    %v53 = vadd.f32 %v26, %v27
    %v54 = vsel %vm48, %v28, 0.0
    %v55 = vadd.f32 %v53, %v54
    %56 = vadd.xlane.f32.xlu0 %v55
    %v57 = vpop.xlane.xlu0 %56
    %v58 = vadd.f32 %v29, %v30
    %v59 = vsel %vm48, %v31, 0.0
    %v60 = vadd.f32 %v58, %v59
    %61 = vadd.xlane.f32.xlu0 %v60
    %v62 = vpop.xlane.xlu0 %61
    %v63 = vadd.f32 %v32, %v33
    %v64 = vsel %vm48, %v34, 0.0
    %v65 = vadd.f32 %v63, %v64
    %66 = vadd.xlane.f32.xlu0 %v65
    %v67 = vpop.xlane.xlu0 %66
    %v68 = vadd.f32 %v35, %v36
    %v69 = vsel %vm48, %v37, 0.0
    %v70 = vadd.f32 %v68, %v69
    %71 = vadd.xlane.f32.xlu0 %v70
    %v72 = vpop.xlane.xlu0 %71
    %v73 = vadd.f32 %v38, %v39
    %v74 = vsel %vm48, %v40, 0.0
    %v75 = vadd.f32 %v73, %v74
    %76 = vadd.xlane.f32.xlu0 %v75
    %v77 = vpop.xlane.xlu0 %76
    %v78 = vadd.f32 %v41, %v42
    %v79 = vsel %vm48, %v43, 0.0
    %v80 = vadd.f32 %v78, %v79
    %81 = vadd.xlane.f32.xlu0 %v80
    %v82 = vpop.xlane.xlu0 %81
    %v83 = vadd.f32 %v44, %v45
    %v84 = vsel %vm48, %v46, 0.0
    %v85 = vadd.f32 %v83, %v84
    %86 = vadd.xlane.f32.xlu0 %v85
    %v87 = vpop.xlane.xlu0 %86
    %v88 = vrcp.pop 288.0
    %v89 = vmul.f32 %v52, %v88
    %v90 = vmul.f32 %v57, %v88
    %v91 = vmul.f32 %v62, %v88
    %v92 = vmul.f32 %v67, %v88
    %v93 = vmul.f32 %v72, %v88
    %v94 = vmul.f32 %v77, %v88
    %v95 = vmul.f32 %v82, %v88
    %v96 = vmul.f32 %v87, %v88
    %v97 = vsub.f32 %v23, %v89
    %v98 = vsub.f32 %v24, %v89
    %v99 = vsub.f32 %v25, %v89
    %v100 = vsub.f32 %v26, %v90
    %v101 = vsub.f32 %v27, %v90
    %v102 = vsub.f32 %v28, %v90
    %v103 = vsub.f32 %v29, %v91
    %v104 = vsub.f32 %v30, %v91
    %v105 = vsub.f32 %v31, %v91
    %v106 = vsub.f32 %v32, %v92
    %v107 = vsub.f32 %v33, %v92
    %v108 = vsub.f32 %v34, %v92
    %v109 = vsub.f32 %v35, %v93
    %v110 = vsub.f32 %v36, %v93
    %v111 = vsub.f32 %v37, %v93
    %v112 = vsub.f32 %v38, %v94
    %v113 = vsub.f32 %v39, %v94
    %v114 = vsub.f32 %v40, %v94
    %v115 = vsub.f32 %v41, %v95
    %v116 = vsub.f32 %v42, %v95
    %v117 = vsub.f32 %v43, %v95
    %v118 = vsub.f32 %v44, %v96
    %v119 = vsub.f32 %v45, %v96
    %v120 = vsub.f32 %v46, %v96
    %v121 = vmul.f32 %v97, %v97
    %v122 = vmul.f32 %v98, %v98
    %v123 = vmul.f32 %v99, %v99
    %v124 = vmul.f32 %v100, %v100
    %v125 = vmul.f32 %v101, %v101
    %v126 = vmul.f32 %v102, %v102
    %v127 = vmul.f32 %v103, %v103
    %v128 = vmul.f32 %v104, %v104
    %v129 = vmul.f32 %v105, %v105
    %v130 = vmul.f32 %v106, %v106
    %v131 = vmul.f32 %v107, %v107
    %v132 = vmul.f32 %v108, %v108
    %v133 = vmul.f32 %v109, %v109
    %v134 = vmul.f32 %v110, %v110
    %v135 = vmul.f32 %v111, %v111
    %v136 = vmul.f32 %v112, %v112
    %v137 = vmul.f32 %v113, %v113
    %v138 = vmul.f32 %v114, %v114
    %v139 = vmul.f32 %v115, %v115
    %v140 = vmul.f32 %v116, %v116
    %v141 = vmul.f32 %v117, %v117
    %v142 = vmul.f32 %v118, %v118
    %v143 = vmul.f32 %v119, %v119
    %v144 = vmul.f32 %v120, %v120
    %v145 = vadd.f32 %v121, %v122
    %v146 = vsel %vm48, %v123, 0.0
    %v147 = vadd.f32 %v145, %v146
    %148 = vadd.xlane.f32.xlu0 %v147
    %v149 = vpop.xlane.xlu0 %148
    %v150 = vadd.f32 %v124, %v125
    %v151 = vsel %vm48, %v126, 0.0
    %v152 = vadd.f32 %v150, %v151
    %153 = vadd.xlane.f32.xlu0 %v152
    %v154 = vpop.xlane.xlu0 %153
    %v155 = vadd.f32 %v127, %v128
    %v156 = vsel %vm48, %v129, 0.0
    %v157 = vadd.f32 %v155, %v156
    %158 = vadd.xlane.f32.xlu0 %v157
    %v159 = vpop.xlane.xlu0 %158
    %v160 = vadd.f32 %v130, %v131
    %v161 = vsel %vm48, %v132, 0.0
    %v162 = vadd.f32 %v160, %v161
    %163 = vadd.xlane.f32.xlu0 %v162
    %v164 = vpop.xlane.xlu0 %163
    %v165 = vadd.f32 %v133, %v134
    %v166 = vsel %vm48, %v135, 0.0
    %v167 = vadd.f32 %v165, %v166
    %168 = vadd.xlane.f32.xlu0 %v167
    %v169 = vpop.xlane.xlu0 %168
    %v170 = vadd.f32 %v136, %v137
    %v171 = vsel %vm48, %v138, 0.0
    %v172 = vadd.f32 %v170, %v171
    %173 = vadd.xlane.f32.xlu0 %v172
    %v174 = vpop.xlane.xlu0 %173
    %v175 = vadd.f32 %v139, %v140
    %v176 = vsel %vm48, %v141, 0.0
    %v177 = vadd.f32 %v175, %v176
    %178 = vadd.xlane.f32.xlu0 %v177
    %v179 = vpop.xlane.xlu0 %178
    %v180 = vadd.f32 %v142, %v143
    %v181 = vsel %vm48, %v144, 0.0
    %v182 = vadd.f32 %v180, %v181
    %183 = vadd.xlane.f32.xlu0 %v182
    %v184 = vpop.xlane.xlu0 %183
    %v185 = vrcp.pop 287.0
    %v186 = vmul.f32 %v149, %v185
    %v187 = vmul.f32 %v154, %v185
    %v188 = vmul.f32 %v159, %v185
    %v189 = vmul.f32 %v164, %v185
    %v190 = vmul.f32 %v169, %v185
    %v191 = vmul.f32 %v174, %v185
    %v192 = vmul.f32 %v179, %v185
    %v193 = vmul.f32 %v184, %v185
    %v194 = vrsqrt.pop %v186
    %v195 = vmul.f32 %v186, %v194
    %vm196 = vcmp.eq.f32.partialorder %v186, inf
    %v197 = vsel %vm196, %v186, %v195
    %vm198 = vcmp.eq.f32.partialorder %v186, 0.0
    %v199 = vand.u32 %v186, 2147483648
    %v200 = vsel %vm198, %v199, %v197
    %v201 = vrsqrt.pop %v187
    %v202 = vmul.f32 %v187, %v201
    %vm203 = vcmp.eq.f32.partialorder %v187, inf
    %v204 = vsel %vm203, %v187, %v202
    %vm205 = vcmp.eq.f32.partialorder %v187, 0.0
    %v206 = vand.u32 %v187, 2147483648
    %v207 = vsel %vm205, %v206, %v204
    %v208 = vrsqrt.pop %v188
    %v209 = vmul.f32 %v188, %v208
    %vm210 = vcmp.eq.f32.partialorder %v188, inf
    %v211 = vsel %vm210, %v188, %v209
    %vm212 = vcmp.eq.f32.partialorder %v188, 0.0
    %v213 = vand.u32 %v188, 2147483648
    %v214 = vsel %vm212, %v213, %v211
    %v215 = vrsqrt.pop %v189
    %v216 = vmul.f32 %v189, %v215
    %vm217 = vcmp.eq.f32.partialorder %v189, inf
    %v218 = vsel %vm217, %v189, %v216
    %vm219 = vcmp.eq.f32.partialorder %v189, 0.0
    %v220 = vand.u32 %v189, 2147483648
    %v221 = vsel %vm219, %v220, %v218
    %v222 = vrsqrt.pop %v190
    %v223 = vmul.f32 %v190, %v222
    %vm224 = vcmp.eq.f32.partialorder %v190, inf
    %v225 = vsel %vm224, %v190, %v223
    %vm226 = vcmp.eq.f32.partialorder %v190, 0.0
    %v227 = vand.u32 %v190, 2147483648
    %v228 = vsel %vm226, %v227, %v225
    %v229 = vrsqrt.pop %v191
    %v230 = vmul.f32 %v191, %v229
    %vm231 = vcmp.eq.f32.partialorder %v191, inf
    %v232 = vsel %vm231, %v191, %v230
    %vm233 = vcmp.eq.f32.partialorder %v191, 0.0
    %v234 = vand.u32 %v191, 2147483648
    %v235 = vsel %vm233, %v234, %v232
    %v236 = vrsqrt.pop %v192
    %v237 = vmul.f32 %v192, %v236
    %vm238 = vcmp.eq.f32.partialorder %v192, inf
    %v239 = vsel %vm238, %v192, %v237
    %vm240 = vcmp.eq.f32.partialorder %v192, 0.0
    %v241 = vand.u32 %v192, 2147483648
    %v242 = vsel %vm240, %v241, %v239
    %v243 = vrsqrt.pop %v193
    %v244 = vmul.f32 %v193, %v243
    %vm245 = vcmp.eq.f32.partialorder %v193, inf
    %v246 = vsel %vm245, %v193, %v244
    %vm247 = vcmp.eq.f32.partialorder %v193, 0.0
    %v248 = vand.u32 %v193, 2147483648
    %v249 = vsel %vm247, %v248, %v246
    %v250 = vadd.f32 %v200, 1e-05
    %v251 = vadd.f32 %v207, 1e-05
    %v252 = vadd.f32 %v214, 1e-05
    %v253 = vadd.f32 %v221, 1e-05
    %v254 = vadd.f32 %v228, 1e-05
    %v255 = vadd.f32 %v235, 1e-05
    %v256 = vadd.f32 %v242, 1e-05
    %v257 = vadd.f32 %v249, 1e-05
    %v258 = vrcp.pop %v250
    %v259 = vmul.f32 %v97, %v258
    %v260 = vmul.f32 %v98, %v258
    %v261 = vmul.f32 %v99, %v258
    %v262 = vrcp.pop %v251
    %v263 = vmul.f32 %v100, %v262
    %v264 = vmul.f32 %v101, %v262
    %v265 = vmul.f32 %v102, %v262
    %v266 = vrcp.pop %v252
    %v267 = vmul.f32 %v103, %v266
    %v268 = vmul.f32 %v104, %v266
    %v269 = vmul.f32 %v105, %v266
    %v270 = vrcp.pop %v253
    %v271 = vmul.f32 %v106, %v270
    %v272 = vmul.f32 %v107, %v270
    %v273 = vmul.f32 %v108, %v270
    %v274 = vrcp.pop %v254
    %v275 = vmul.f32 %v109, %v274
    %v276 = vmul.f32 %v110, %v274
    %v277 = vmul.f32 %v111, %v274
    %v278 = vrcp.pop %v255
    %v279 = vmul.f32 %v112, %v278
    %v280 = vmul.f32 %v113, %v278
    %v281 = vmul.f32 %v114, %v278
    %v282 = vrcp.pop %v256
    %v283 = vmul.f32 %v115, %v282
    %v284 = vmul.f32 %v116, %v282
    %v285 = vmul.f32 %v117, %v282
    %v286 = vrcp.pop %v257
    %v287 = vmul.f32 %v118, %v286
    %v288 = vmul.f32 %v119, %v286
    %v289 = vmul.f32 %v120, %v286
    %290 = vst [vmem:[#allocation5] sm:$0xff] %v259
    %291 = vst [vmem:[#allocation5 + $0x8] sm:$0xff] %v260
    %292 = vst.msk [vmem:[#allocation5 + $0x10] sm:$0xff] %vm48, %v261
    %293 = vst [vmem:[#allocation5 + $0x18] sm:$0xff] %v263
    %294 = vst [vmem:[#allocation5 + $0x20] sm:$0xff] %v264
    %295 = vst.msk [vmem:[#allocation5 + $0x28] sm:$0xff] %vm48, %v265
    %296 = vst [vmem:[#allocation5 + $0x30] sm:$0xff] %v267
    %297 = vst [vmem:[#allocation5 + $0x38] sm:$0xff] %v268
    %298 = vst.msk [vmem:[#allocation5 + $0x40] sm:$0xff] %vm48, %v269
    %299 = vst [vmem:[#allocation5 + $0x48] sm:$0xff] %v271
    %300 = vst [vmem:[#allocation5 + $0x50] sm:$0xff] %v272
    %301 = vst.msk [vmem:[#allocation5 + $0x58] sm:$0xff] %vm48, %v273
    %302 = vst [vmem:[#allocation5 + $0x60] sm:$0xff] %v275
    %303 = vst [vmem:[#allocation5 + $0x68] sm:$0xff] %v276
    %304 = vst.msk [vmem:[#allocation5 + $0x70] sm:$0xff] %vm48, %v277
    %305 = vst [vmem:[#allocation5 + $0x78] sm:$0xff] %v279
    %306 = vst [vmem:[#allocation5 + $0x80] sm:$0xff] %v280
    %307 = vst.msk [vmem:[#allocation5 + $0x88] sm:$0xff] %vm48, %v281
    %308 = vst [vmem:[#allocation5 + $0x90] sm:$0xff] %v283
    %309 = vst [vmem:[#allocation5 + $0x98] sm:$0xff] %v284
    %310 = vst.msk [vmem:[#allocation5 + $0xa0] sm:$0xff] %vm48, %v285
    %311 = vst [vmem:[#allocation5 + $0xa8] sm:$0xff] %v287
    %312 = vst [vmem:[#allocation5 + $0xb0] sm:$0xff] %v288
    %313 = vst.msk [vmem:[#allocation5 + $0xb8] sm:$0xff] %vm48, %v289
    // Predicated region
    $region10: #{tpu_custom_call.1} parent=1 // pred_check
      _
    $region11: #{tpu_custom_call.1} parent=1 // pred_check_branch
      %315 = sbr.rel (0) target = $region13
    $region12: #{tpu_custom_call.1} parent=1 // pred_region
      %s317 = ssub.s32 3072, 3072
      %318 = vsyncadd [#allocation4], %s317
      %s319 = sshll.u32 [#allocation5], 4
      %s320 = int_to_ptr.vmem [resolvable:$true] %s319
      %325 = dma.vmem_to_hbm [thread:$0]  %s320, 3072, %s1, [#allocation4], 384, 384, 24
    $region13: #{tpu_custom_call.1} parent=1 // pred_fallthru
      _
    // Predicated region
    $region14: #{tpu_custom_call.1} parent=1 // pred_check
      _
    $region15: #{tpu_custom_call.1} parent=1 // pred_check_branch
      %327 = sbr.rel (0) target = $region17
    $region16: #{tpu_custom_call.1} parent=1 // pred_region
      %328 = dma.done [#allocation4], 3072
    $region17: #{tpu_custom_call.1} parent=1 // pred_fallthru
      _
    %329 = vsyncpa [#allocation3], 1
    %330 = vsyncpa [#allocation4], 1

</llo_original>
